<compile_context>
chip_gen: v7x
topology: tpu7x:2x2x1
jax: 0.10.0
libtpu: 0.0.40
codegen_flags: <defaults>
</compile_context>

<pallas_src>
import jax
import jax.numpy as jnp
from jax import lax
from jax.experimental import pallas as pl
from jax.experimental.pallas import tpu as pltpu

LN_EPS = 1e-5
_LANE = 128
_SUBLANE = 8


def _round_up(x, m):
    return ((x + m - 1) // m) * m


def _masked_layer_norm(x, gamma, beta, inv_n):
    """One-pass LayerNorm over a lane-padded feature axis.

    Padded lanes of `x` are zero, so sum/sum-of-squares are exact; `inv_n` is
    1/real_feature_dim.  gamma/beta are zero on padded lanes, so the output is
    exactly zero there (keeps downstream matmuls clean)."""
    s = jnp.sum(x, axis=-1, keepdims=True)
    q = jnp.sum(x * x, axis=-1, keepdims=True)
    mean = s * inv_n
    var = jnp.maximum(q * inv_n - mean * mean, 0.0)
    return (x - mean) * lax.rsqrt(var + LN_EPS) * gamma + beta


def _make_actor_kernel(fc1_dims, fc2_dims, f1p, f2p, nap):
    inv_f1 = 1.0 / float(fc1_dims)
    inv_f2 = 1.0 / float(fc2_dims)

    def kernel(x_ref, w1_ref, w2_ref, w3_ref, vec_ref, mu_ref):
        x = x_ref[...]
        vec = vec_ref[...]          # (8, VMAX) packed slab: b1,g1,be1,b2,g2,be2,b3,_
        b1, g1, be1 = vec[0:1, :f1p], vec[1:2, :f1p], vec[2:3, :f1p]
        b2, g2, be2 = vec[3:4, :f2p], vec[4:5, :f2p], vec[5:6, :f2p]
        b3 = vec[6:7, :nap]

        # fc1 -> relu -> ln1
        a = jnp.dot(x, w1_ref[...], preferred_element_type=jnp.float32) + b1
        a = jnp.maximum(a, 0.0)
        a = _masked_layer_norm(a, g1, be1, inv_f1)

        # fc2 -> relu -> ln2
        a = jnp.dot(a, w2_ref[...], preferred_element_type=jnp.float32) + b2
        a = jnp.maximum(a, 0.0)
        a = _masked_layer_norm(a, g2, be2, inv_f2)

        # mu -> tanh (lane-dense padded output; padded cols are tanh(0)=0)
        m = jnp.dot(a, w3_ref[...], preferred_element_type=jnp.float32) + b3
        mu_ref[...] = jnp.tanh(m).astype(mu_ref.dtype)

    return kernel


def init_params(key, input_dim, fc1_dims, fc2_dims, n_actions):
    """nn.Linear-style U(-1/sqrt(fan_in), +1/sqrt(fan_in)); LN gamma=1, beta=0.
    Weights stored pre-transposed as (in, out)."""
    def linear(k, fan_in, fan_out):
        kw, kb = jax.random.split(k)
        bound = 1.0 / jnp.sqrt(fan_in)
        w = jax.random.uniform(kw, (fan_in, fan_out), jnp.float32, -bound, bound)
        b = jax.random.uniform(kb, (1, fan_out), jnp.float32, -bound, bound)
        return w, b

    k1, k2, k3 = jax.random.split(key, 3)
    w1, b1 = linear(k1, input_dim, fc1_dims)
    w2, b2 = linear(k2, fc1_dims, fc2_dims)
    w3, b3 = linear(k3, fc2_dims, n_actions)
    return dict(
        w1=w1, b1=b1,
        g1=jnp.ones((1, fc1_dims), jnp.float32), be1=jnp.zeros((1, fc1_dims), jnp.float32),
        w2=w2, b2=b2,
        g2=jnp.ones((1, fc2_dims), jnp.float32), be2=jnp.zeros((1, fc2_dims), jnp.float32),
        w3=w3, b3=b3,
    )


def pack_params(params, input_dim, fc1_dims, fc2_dims, n_actions):
    """One-time packing: zero-pad every dim to a lane multiple and pack all
    (1, dim) vectors (biases / LN gamma / LN beta) into a single (8, VMAX) slab."""
    inp = _round_up(input_dim, _LANE)
    f1p = _round_up(fc1_dims, _LANE)
    f2p = _round_up(fc2_dims, _LANE)
    nap = _round_up(n_actions, _LANE)
    vmax = max(f1p, f2p, nap)

    w1 = jnp.zeros((inp, f1p), jnp.float32).at[:input_dim, :fc1_dims].set(params["w1"])
    w2 = jnp.zeros((f1p, f2p), jnp.float32).at[:fc1_dims, :fc2_dims].set(params["w2"])
    w3 = jnp.zeros((f2p, nap), jnp.float32).at[:fc2_dims, :n_actions].set(params["w3"])

    vec = jnp.zeros((8, vmax), jnp.float32)
    vec = vec.at[0, :fc1_dims].set(params["b1"].reshape(-1))
    vec = vec.at[1, :fc1_dims].set(params["g1"].reshape(-1))   # gamma padded with 0
    vec = vec.at[2, :fc1_dims].set(params["be1"].reshape(-1))
    vec = vec.at[3, :fc2_dims].set(params["b2"].reshape(-1))
    vec = vec.at[4, :fc2_dims].set(params["g2"].reshape(-1))
    vec = vec.at[5, :fc2_dims].set(params["be2"].reshape(-1))
    vec = vec.at[6, :n_actions].set(params["b3"].reshape(-1))

    return dict(
        w1=w1, w2=w2, w3=w3, vec=vec,
        dims=(input_dim, fc1_dims, fc2_dims, n_actions),
        padded=(inp, f1p, f2p, nap, vmax),
    )


def actor_forward(state, packed, *, block_batch=256):
    """state: (B, input_dim) f32. packed: output of pack_params."""
    input_dim, fc1_dims, fc2_dims, n_actions = packed["dims"]
    inp, f1p, f2p, nap, vmax = packed["padded"]
    B = state.shape[0]

    # Batch tile: multiple of the 8-row sublane granule; multiples of 256 for
    # larger batches so the MXU weight push/drain is amortized (v6e/v7x).
    bm = min(block_batch, _round_up(B, _SUBLANE))
    b_pad = _round_up(B, bm)
    n_blocks = b_pad // bm

    x = jnp.zeros((b_pad, inp), jnp.float32).at[:B, :input_dim].set(
        state.astype(jnp.float32))

    kernel = _make_actor_kernel(fc1_dims, fc2_dims, f1p, f2p, nap)

    flops = 2 * b_pad * (inp * f1p + f1p * f2p + f2p * nap)
    transcendentals = b_pad * (nap + 2)  # tanh per output lane + 2 rsqrt per row
    bytes_accessed = 4 * (b_pad * inp + inp * f1p + f1p * f2p + f2p * nap
                          + 8 * vmax + b_pad * nap)

    out = pl.pallas_call(
        kernel,
        out_shape=jax.ShapeDtypeStruct((b_pad, nap), jnp.float32),
        grid=(n_blocks,),
        in_specs=[
            pl.BlockSpec((bm, inp), lambda i: (i, 0)),   # activations: tiled over batch
            pl.BlockSpec((inp, f1p), lambda i: (0, 0)),  # weights: VMEM-resident
            pl.BlockSpec((f1p, f2p), lambda i: (0, 0)),
            pl.BlockSpec((f2p, nap), lambda i: (0, 0)),
            pl.BlockSpec((8, vmax), lambda i: (0, 0)),   # packed bias/LN slab
        ],
        out_specs=pl.BlockSpec((bm, nap), lambda i: (i, 0)),
        compiler_params=pltpu.CompilerParams(
            dimension_semantics=("parallel",)),
        cost_estimate=pl.CostEstimate(
            flops=flops,
            transcendentals=transcendentals,
            bytes_accessed=bytes_accessed),
    )(x, packed["w1"], packed["w2"], packed["w3"], packed["vec"])

    return out[:B, :n_actions]


def _layer_norm_ref(x, gamma, beta):
    mean = jnp.mean(x, axis=-1, keepdims=True)
    var = jnp.mean(jnp.square(x - mean), axis=-1, keepdims=True)
    return (x - mean) * lax.rsqrt(var + LN_EPS) * gamma + beta


def actor_forward_ref(state, p):
    a = jnp.maximum(state @ p["w1"] + p["b1"], 0.0)
    a = _layer_norm_ref(a, p["g1"], p["be1"])
    a = jnp.maximum(a @ p["w2"] + p["b2"], 0.0)
    a = _layer_norm_ref(a, p["g2"], p["be2"])
    return jnp.tanh(a @ p["w3"] + p["b3"])


if __name__ == "__main__":
    key = jax.random.PRNGKey(0)
    k_param, k_state = jax.random.split(key)

    batch = 8
    input_dim = 16     # input_dims = (16,)
    fc1_dims = 64
    fc2_dims = 32
    n_actions = 4

    params = init_params(k_param, input_dim, fc1_dims, fc2_dims, n_actions)
    packed = pack_params(params, input_dim, fc1_dims, fc2_dims, n_actions)
    state = jax.random.normal(k_state, (batch, input_dim), jnp.float32)

    mu = actor_forward(state, packed)
    mu = jax.block_until_ready(mu)

    mu_ref = actor_forward_ref(state, params)
    assert mu.shape == (batch, n_actions)
    assert jnp.allclose(mu, mu_ref, atol=1e-4, rtol=1e-4), (
        float(jnp.max(jnp.abs(mu - mu_ref))))

    print("KERNEL_OK")
</pallas_src>

<mosaic_0001>
module attributes {stable_mosaic.version = 11 : i64} {
  func.func @kernel(%arg0: i32, %arg1: memref<8x128xf32, #tpu.memory_space<vmem>>, %arg2: memref<128x128xf32, #tpu.memory_space<vmem>>, %arg3: memref<128x128xf32, #tpu.memory_space<vmem>>, %arg4: memref<128x128xf32, #tpu.memory_space<vmem>>, %arg5: memref<8x128xf32, #tpu.memory_space<vmem>>, %arg6: memref<8x128xf32, #tpu.memory_space<vmem>>) attributes {dimension_semantics = [#tpu.dimension_semantics<parallel>], iteration_bounds = array<i64: 1>, scalar_prefetch = 0 : i64, scratch_operands = 0 : i64, tpu.core_type = #tpu.core_type<tc>, window_params = [{transform_indices = @transform_0, window_bounds = array<i64: 8, 128>}, {pipeline_mode = #tpu.pipeline_mode<synchronous>, transform_indices = @transform_1, window_bounds = array<i64: 128, 128>}, {pipeline_mode = #tpu.pipeline_mode<synchronous>, transform_indices = @transform_2, window_bounds = array<i64: 128, 128>}, {pipeline_mode = #tpu.pipeline_mode<synchronous>, transform_indices = @transform_3, window_bounds = array<i64: 128, 128>}, {pipeline_mode = #tpu.pipeline_mode<synchronous>, transform_indices = @transform_4, window_bounds = array<i64: 8, 128>}, {transform_indices = @transform_5, window_bounds = array<i64: 8, 128>}]} {
    %c0 = arith.constant 0 : index
    %c0_0 = arith.constant 0 : index
    %0 = vector.load %arg1[%c0, %c0_0] : memref<8x128xf32, #tpu.memory_space<vmem>>, vector<8x128xf32>
    %c0_1 = arith.constant 0 : index
    %c0_2 = arith.constant 0 : index
    %1 = vector.load %arg5[%c0_1, %c0_2] : memref<8x128xf32, #tpu.memory_space<vmem>>, vector<8x128xf32>
    %2 = vector.extract_strided_slice %1 {offsets = [0, 0], sizes = [1, 128], strides = [1, 1]} : vector<8x128xf32> to vector<1x128xf32>
    %3 = vector.extract_strided_slice %1 {offsets = [1, 0], sizes = [1, 128], strides = [1, 1]} : vector<8x128xf32> to vector<1x128xf32>
    %4 = vector.extract_strided_slice %1 {offsets = [2, 0], sizes = [1, 128], strides = [1, 1]} : vector<8x128xf32> to vector<1x128xf32>
    %5 = vector.extract_strided_slice %1 {offsets = [3, 0], sizes = [1, 128], strides = [1, 1]} : vector<8x128xf32> to vector<1x128xf32>
    %6 = vector.extract_strided_slice %1 {offsets = [4, 0], sizes = [1, 128], strides = [1, 1]} : vector<8x128xf32> to vector<1x128xf32>
    %7 = vector.extract_strided_slice %1 {offsets = [5, 0], sizes = [1, 128], strides = [1, 1]} : vector<8x128xf32> to vector<1x128xf32>
    %8 = vector.extract_strided_slice %1 {offsets = [6, 0], sizes = [1, 128], strides = [1, 1]} : vector<8x128xf32> to vector<1x128xf32>
    %c0_3 = arith.constant 0 : index
    %c0_4 = arith.constant 0 : index
    %9 = vector.load %arg2[%c0_3, %c0_4] : memref<128x128xf32, #tpu.memory_space<vmem>>, vector<128x128xf32>
    %cst = arith.constant dense<0.000000e+00> : vector<8x128xf32>
    %10 = tpu.matmul %0, %9, %cst {dimension_numbers = #tpu.dot_dimension_numbers<[1], [0], [0], [1], [0, 0, 1, 1], [], []>} : vector<8x128xf32>, vector<128x128xf32>, vector<8x128xf32> -> vector<8x128xf32>
    %11 = vector.broadcast %2 : vector<1x128xf32> to vector<8x128xf32>
    %12 = arith.addf %10, %11 : vector<8x128xf32>
    %cst_5 = arith.constant 0.000000e+00 : f32
    %13 = vector.broadcast %cst_5 : f32 to vector<8x128xf32>
    %14 = arith.maximumf %12, %13 : vector<8x128xf32>
    %cst_6 = arith.constant dense<0.000000e+00> : vector<8xf32>
    %15 = vector.multi_reduction <add>, %14, %cst_6 [1] : vector<8x128xf32> to vector<8xf32>
    %16 = vector.shape_cast %15 : vector<8xf32> to vector<8x1xf32>
    %17 = arith.mulf %14, %14 : vector<8x128xf32>
    %cst_7 = arith.constant dense<0.000000e+00> : vector<8xf32>
    %18 = vector.multi_reduction <add>, %17, %cst_7 [1] : vector<8x128xf32> to vector<8xf32>
    %19 = vector.shape_cast %18 : vector<8xf32> to vector<8x1xf32>
    %cst_8 = arith.constant 1.562500e-02 : f32
    %20 = vector.broadcast %cst_8 : f32 to vector<8x1xf32>
    %21 = arith.mulf %16, %20 : vector<8x1xf32>
    %cst_9 = arith.constant 1.562500e-02 : f32
    %22 = vector.broadcast %cst_9 : f32 to vector<8x1xf32>
    %23 = arith.mulf %19, %22 : vector<8x1xf32>
    %24 = arith.mulf %21, %21 : vector<8x1xf32>
    %25 = arith.subf %23, %24 : vector<8x1xf32>
    %cst_10 = arith.constant 0.000000e+00 : f32
    %26 = vector.broadcast %cst_10 : f32 to vector<8x1xf32>
    %27 = arith.maximumf %25, %26 : vector<8x1xf32>
    %28 = vector.broadcast %21 : vector<8x1xf32> to vector<8x128xf32>
    %29 = arith.subf %14, %28 : vector<8x128xf32>
    %cst_11 = arith.constant 9.99999974E-6 : f32
    %30 = vector.broadcast %cst_11 : f32 to vector<8x1xf32>
    %31 = arith.addf %27, %30 : vector<8x1xf32>
    %32 = math.rsqrt %31 : vector<8x1xf32>
    %33 = vector.broadcast %32 : vector<8x1xf32> to vector<8x128xf32>
    %34 = arith.mulf %29, %33 : vector<8x128xf32>
    %35 = vector.broadcast %3 : vector<1x128xf32> to vector<8x128xf32>
    %36 = arith.mulf %34, %35 : vector<8x128xf32>
    %37 = vector.broadcast %4 : vector<1x128xf32> to vector<8x128xf32>
    %38 = arith.addf %36, %37 : vector<8x128xf32>
    %c0_12 = arith.constant 0 : index
    %c0_13 = arith.constant 0 : index
    %39 = vector.load %arg3[%c0_12, %c0_13] : memref<128x128xf32, #tpu.memory_space<vmem>>, vector<128x128xf32>
    %cst_14 = arith.constant dense<0.000000e+00> : vector<8x128xf32>
    %40 = tpu.matmul %38, %39, %cst_14 {dimension_numbers = #tpu.dot_dimension_numbers<[1], [0], [0], [1], [0, 0, 1, 1], [], []>} : vector<8x128xf32>, vector<128x128xf32>, vector<8x128xf32> -> vector<8x128xf32>
    %41 = vector.broadcast %5 : vector<1x128xf32> to vector<8x128xf32>
    %42 = arith.addf %40, %41 : vector<8x128xf32>
    %cst_15 = arith.constant 0.000000e+00 : f32
    %43 = vector.broadcast %cst_15 : f32 to vector<8x128xf32>
    %44 = arith.maximumf %42, %43 : vector<8x128xf32>
    %cst_16 = arith.constant dense<0.000000e+00> : vector<8xf32>
    %45 = vector.multi_reduction <add>, %44, %cst_16 [1] : vector<8x128xf32> to vector<8xf32>
    %46 = vector.shape_cast %45 : vector<8xf32> to vector<8x1xf32>
    %47 = arith.mulf %44, %44 : vector<8x128xf32>
    %cst_17 = arith.constant dense<0.000000e+00> : vector<8xf32>
    %48 = vector.multi_reduction <add>, %47, %cst_17 [1] : vector<8x128xf32> to vector<8xf32>
    %49 = vector.shape_cast %48 : vector<8xf32> to vector<8x1xf32>
    %cst_18 = arith.constant 3.125000e-02 : f32
    %50 = vector.broadcast %cst_18 : f32 to vector<8x1xf32>
    %51 = arith.mulf %46, %50 : vector<8x1xf32>
    %cst_19 = arith.constant 3.125000e-02 : f32
    %52 = vector.broadcast %cst_19 : f32 to vector<8x1xf32>
    %53 = arith.mulf %49, %52 : vector<8x1xf32>
    %54 = arith.mulf %51, %51 : vector<8x1xf32>
    %55 = arith.subf %53, %54 : vector<8x1xf32>
    %cst_20 = arith.constant 0.000000e+00 : f32
    %56 = vector.broadcast %cst_20 : f32 to vector<8x1xf32>
    %57 = arith.maximumf %55, %56 : vector<8x1xf32>
    %58 = vector.broadcast %51 : vector<8x1xf32> to vector<8x128xf32>
    %59 = arith.subf %44, %58 : vector<8x128xf32>
    %cst_21 = arith.constant 9.99999974E-6 : f32
    %60 = vector.broadcast %cst_21 : f32 to vector<8x1xf32>
    %61 = arith.addf %57, %60 : vector<8x1xf32>
    %62 = math.rsqrt %61 : vector<8x1xf32>
    %63 = vector.broadcast %62 : vector<8x1xf32> to vector<8x128xf32>
    %64 = arith.mulf %59, %63 : vector<8x128xf32>
    %65 = vector.broadcast %6 : vector<1x128xf32> to vector<8x128xf32>
    %66 = arith.mulf %64, %65 : vector<8x128xf32>
    %67 = vector.broadcast %7 : vector<1x128xf32> to vector<8x128xf32>
    %68 = arith.addf %66, %67 : vector<8x128xf32>
    %c0_22 = arith.constant 0 : index
    %c0_23 = arith.constant 0 : index
    %69 = vector.load %arg4[%c0_22, %c0_23] : memref<128x128xf32, #tpu.memory_space<vmem>>, vector<128x128xf32>
    %cst_24 = arith.constant dense<0.000000e+00> : vector<8x128xf32>
    %70 = tpu.matmul %68, %69, %cst_24 {dimension_numbers = #tpu.dot_dimension_numbers<[1], [0], [0], [1], [0, 0, 1, 1], [], []>} : vector<8x128xf32>, vector<128x128xf32>, vector<8x128xf32> -> vector<8x128xf32>
    %71 = vector.broadcast %8 : vector<1x128xf32> to vector<8x128xf32>
    %72 = arith.addf %70, %71 : vector<8x128xf32>
    %73 = math.tanh %72 : vector<8x128xf32>
    %c0_25 = arith.constant 0 : index
    %c0_26 = arith.constant 0 : index
    %74 = vector.load %arg6[%c0_25, %c0_26] : memref<8x128xf32, #tpu.memory_space<vmem>>, vector<8x128xf32>
    tpu.vector_store %arg6[%c0_25, %c0_26], %73 {strides = array<i32>} : memref<8x128xf32, #tpu.memory_space<vmem>>, vector<8x128xf32>,
    return
  }
  func.func @transform_0(%arg0: i32) -> (i32, i32) {
    %c0_i32 = arith.constant 0 : i32
    %c0_i32_0 = arith.constant 0 : i32
    return %arg0, %c0_i32 : i32, i32
  }
  func.func @transform_1(%arg0: i32) -> (i32, i32) {
    %c0_i32 = arith.constant 0 : i32
    %c0_i32_0 = arith.constant 0 : i32
    %c0_i32_1 = arith.constant 0 : i32
    return %c0_i32, %c0_i32_0 : i32, i32
  }
  func.func @transform_2(%arg0: i32) -> (i32, i32) {
    %c0_i32 = arith.constant 0 : i32
    %c0_i32_0 = arith.constant 0 : i32
    %c0_i32_1 = arith.constant 0 : i32
    return %c0_i32, %c0_i32_0 : i32, i32
  }
  func.func @transform_3(%arg0: i32) -> (i32, i32) {
    %c0_i32 = arith.constant 0 : i32
    %c0_i32_0 = arith.constant 0 : i32
    %c0_i32_1 = arith.constant 0 : i32
    return %c0_i32, %c0_i32_0 : i32, i32
  }
  func.func @transform_4(%arg0: i32) -> (i32, i32) {
    %c0_i32 = arith.constant 0 : i32
    %c0_i32_0 = arith.constant 0 : i32
    %c0_i32_1 = arith.constant 0 : i32
    return %c0_i32, %c0_i32_0 : i32, i32
  }
  func.func @transform_5(%arg0: i32) -> (i32, i32) {
    %c0_i32 = arith.constant 0 : i32
    %c0_i32_0 = arith.constant 0 : i32
    return %arg0, %c0_i32 : i32, i32
  }
}

</mosaic_0001>

<llo_original>
// kernel: tpu_custom_call.1
$region0: #{tpu_custom_call.1}
  #allocation0 [shape = 'u32[]', space=smem, size = 0x4, offset = 0x4, fixed_abs, tag = 'smem constant byte address 0x4 - core index']
  #allocation1 [shape = 'u32[144,128]{1,0:T(1,128)}', space=vmem, size = 0x12000, scoped, tag = 'internal scratch']
  %s0 = inlined_call_operand.hbm [shape: f32[8,128], index: 0, kind: input, shape index: {}]
  %s1 = inlined_call_operand.hbm [shape: f32[128,128], index: 1, kind: input, shape index: {}]
  %s2 = inlined_call_operand.hbm [shape: f32[128,128], index: 2, kind: input, shape index: {}]
  %s3 = inlined_call_operand.hbm [shape: f32[128,128], index: 3, kind: input, shape index: {}]
  %s4 = inlined_call_operand.vmem [shape: f32[8,128], index: 4, kind: input, shape index: {}]
  %s5 = inlined_call_operand.hbm [shape: f32[8,128], index: 5, kind: output, shape index: {}]
  %s6 = sld [smem:[#allocation0]]
  $region46: #{tpu_custom_call.1} parent=0
    _
  %s8 = ssub.s32 1, %s6
  %s9 = scalar_select 0, %s8, %s6
  $region1: #{tpu_custom_call.1} parent=0
    #allocation2 [shape = 'u8[4096]{0}', space=vmem, size = 0x1000, scoped, tag = 'input window, operand 0, single buffered']
    #allocation3 [shape = 's32[1]{0}', space=sflag, size = 0x4, scoped, tag = 'scoped memory for tpu_custom_call.1']
    #allocation4 [shape = 's32[1]{0}', space=sflag, size = 0x4, scoped, tag = 'scoped memory for tpu_custom_call.1']
    #allocation5 [shape = 'u8[65536]{0}', space=vmem, size = 0x10000, scoped, tag = 'input window, operand 1, single buffered']
    #allocation6 [shape = 's32[1]{0}', space=sflag, size = 0x4, scoped, tag = 'scoped memory for tpu_custom_call.1']
    #allocation7 [shape = 'u8[65536]{0}', space=vmem, size = 0x10000, scoped, tag = 'input window, operand 2, single buffered']
    #allocation8 [shape = 'u8[65536]{0}', space=vmem, size = 0x10000, scoped, tag = 'input window, operand 3, single buffered']
    #allocation9 [shape = 's32[1]{0}', space=sflag, size = 0x4, scoped, tag = 'scoped memory for tpu_custom_call.1']
    #allocation10 [shape = 'u8[4096]{0}', space=vmem, size = 0x1000, scoped, tag = 'output window, operand 0, single buffered']
    %10 = vsyncpa [#allocation3], 0
    %11 = vsyncpa [#allocation6], 0
    %12 = vsyncpa [#allocation9], 0
    %13 = vsyncpa [#allocation4], 0
    // Predicated region
    $region2: #{tpu_custom_call.1} parent=1 // pred_check
      _
    $region3: #{tpu_custom_call.1} parent=1 // pred_check_branch
      %15 = sbr.rel (0) target = $region5
    $region4: #{tpu_custom_call.1} parent=1 // pred_region
      %s17 = ssub.s32 128, 128
      %18 = vsyncadd [#allocation3], %s17
      %s20 = sshll.u32 [#allocation2], 4
      %s21 = int_to_ptr.vmem [resolvable:$true] %s20
      %23 = dma.hbm_to_vmem [thread:$0]  %s0, 128, %s21, [#allocation3]
    $region5: #{tpu_custom_call.1} parent=1 // pred_fallthru
      _
    // Predicated region
    $region6: #{tpu_custom_call.1} parent=1 // pred_check
      _
    $region7: #{tpu_custom_call.1} parent=1 // pred_check_branch
      %25 = sbr.rel (0) target = $region9
    $region8: #{tpu_custom_call.1} parent=1 // pred_region
      %s27 = ssub.s32 2048, 2048
      %28 = vsyncadd [#allocation6], %s27
      %s29 = sshll.u32 [#allocation5], 4
      %s30 = int_to_ptr.vmem [resolvable:$true] %s29
      %35 = dma.hbm_to_vmem [thread:$0]  %s1, 2048, %s30, [#allocation6], 128, 128, 8
    $region9: #{tpu_custom_call.1} parent=1 // pred_fallthru
      _
    // Predicated region
    $region10: #{tpu_custom_call.1} parent=1 // pred_check
      _
    $region11: #{tpu_custom_call.1} parent=1 // pred_check_branch
      %37 = sbr.rel (0) target = $region13
    $region12: #{tpu_custom_call.1} parent=1 // pred_region
      %s39 = ssub.s32 2048, 2048
      %40 = vsyncadd [#allocation6], %s39
      %s41 = sshll.u32 [#allocation7], 4
      %s42 = int_to_ptr.vmem [resolvable:$true] %s41
      %47 = dma.hbm_to_vmem [thread:$0]  %s2, 2048, %s42, [#allocation6], 128, 128, 8
    $region13: #{tpu_custom_call.1} parent=1 // pred_fallthru
      _
    // Predicated region
    $region14: #{tpu_custom_call.1} parent=1 // pred_check
      _
    $region15: #{tpu_custom_call.1} parent=1 // pred_check_branch
      %49 = sbr.rel (0) target = $region17
    $region16: #{tpu_custom_call.1} parent=1 // pred_region
      %s51 = ssub.s32 2048, 2048
      %52 = vsyncadd [#allocation9], %s51
      %s53 = sshll.u32 [#allocation8], 4
      %s54 = int_to_ptr.vmem [resolvable:$true] %s53
      %59 = dma.hbm_to_vmem [thread:$0]  %s3, 2048, %s54, [#allocation9], 128, 128, 8
    $region17: #{tpu_custom_call.1} parent=1 // pred_fallthru
      _
    // Predicated region
    $region18: #{tpu_custom_call.1} parent=1 // pred_check
      _
    $region19: #{tpu_custom_call.1} parent=1 // pred_check_branch
      %61 = sbr.rel (0) target = $region21
    $region20: #{tpu_custom_call.1} parent=1 // pred_region
      _
    $region21: #{tpu_custom_call.1} parent=1 // pred_fallthru
      _
    // Predicated region
    $region22: #{tpu_custom_call.1} parent=1 // pred_check
      _
    $region23: #{tpu_custom_call.1} parent=1 // pred_check_branch
      %63 = sbr.rel (0) target = $region25
    $region24: #{tpu_custom_call.1} parent=1 // pred_region
      %64 = dma.done [#allocation3], 128
    $region25: #{tpu_custom_call.1} parent=1 // pred_fallthru
      _
    // Predicated region
    $region26: #{tpu_custom_call.1} parent=1 // pred_check
      _
    $region27: #{tpu_custom_call.1} parent=1 // pred_check_branch
      %66 = sbr.rel (0) target = $region29
    $region28: #{tpu_custom_call.1} parent=1 // pred_region
      %67 = dma.done [#allocation6], 2048
    $region29: #{tpu_custom_call.1} parent=1 // pred_fallthru
      _
    // Predicated region
    $region30: #{tpu_custom_call.1} parent=1 // pred_check
      _
    $region31: #{tpu_custom_call.1} parent=1 // pred_check_branch
      %69 = sbr.rel (0) target = $region33
    $region32: #{tpu_custom_call.1} parent=1 // pred_region
      %70 = dma.done [#allocation6], 2048
    $region33: #{tpu_custom_call.1} parent=1 // pred_fallthru
      _
    // Predicated region
    $region34: #{tpu_custom_call.1} parent=1 // pred_check
      _
    $region35: #{tpu_custom_call.1} parent=1 // pred_check_branch
      %72 = sbr.rel (0) target = $region37
    $region36: #{tpu_custom_call.1} parent=1 // pred_region
      %73 = dma.done [#allocation9], 2048
    $region37: #{tpu_custom_call.1} parent=1 // pred_fallthru
      _
    %v74 = vld [vmem:[#allocation2] sm:$0xff]
    %v75 = vld [vmem:[%s4] sm:$0xff]
    %v76 = vld [vmem:[#allocation5] sm:$0xff]
    %v77 = vld [vmem:[#allocation5 + $0x8] sm:$0xff]
    %v78 = vld [vmem:[#allocation5 + $0x10] sm:$0xff]
    %v79 = vld [vmem:[#allocation5 + $0x18] sm:$0xff]
    %v80 = vld [vmem:[#allocation5 + $0x20] sm:$0xff]
    %v81 = vld [vmem:[#allocation5 + $0x28] sm:$0xff]
    %v82 = vld [vmem:[#allocation5 + $0x30] sm:$0xff]
    %v83 = vld [vmem:[#allocation5 + $0x38] sm:$0xff]
    %v84 = vld [vmem:[#allocation5 + $0x40] sm:$0xff]
    %v85 = vld [vmem:[#allocation5 + $0x48] sm:$0xff]
    %v86 = vld [vmem:[#allocation5 + $0x50] sm:$0xff]
    %v87 = vld [vmem:[#allocation5 + $0x58] sm:$0xff]
    %v88 = vld [vmem:[#allocation5 + $0x60] sm:$0xff]
    %v89 = vld [vmem:[#allocation5 + $0x68] sm:$0xff]
    %v90 = vld [vmem:[#allocation5 + $0x70] sm:$0xff]
    %v91 = vld [vmem:[#allocation5 + $0x78] sm:$0xff]
    %v92 = vlaneseq
    %v93 = vshrl.u32 %v92, 7
    %v94 = vsub.s32 0, %v93
    %v95 = vrot.slane %v75, %v94
    %96 = vmatprep.subr.mxu0 0.0
    %97 = vmatpush1.msra.mxu0 %v76
    %98 = vmatprep.subr.mxu0 0.0
    %99 = vmatpush1.msra.mxu0 %v77
    %100 = vmatprep.subr.mxu0 0.0
    %101 = vmatpush1.msra.mxu0 %v78
    %102 = vmatprep.subr.mxu0 0.0
    %103 = vmatpush1.msra.mxu0 %v79
    %104 = vmatprep.subr.mxu0 0.0
    %105 = vmatpush1.msra.mxu0 %v80
    %106 = vmatprep.subr.mxu0 0.0
    %107 = vmatpush1.msra.mxu0 %v81
    %108 = vmatprep.subr.mxu0 0.0
    %109 = vmatpush1.msra.mxu0 %v82
    %110 = vmatprep.subr.mxu0 0.0
    %111 = vmatpush1.msra.mxu0 %v83
    %112 = vmatprep.subr.mxu0 0.0
    %113 = vmatpush1.msra.mxu0 %v84
    %114 = vmatprep.subr.mxu0 0.0
    %115 = vmatpush1.msra.mxu0 %v85
    %116 = vmatprep.subr.mxu0 0.0
    %117 = vmatpush1.msra.mxu0 %v86
    %118 = vmatprep.subr.mxu0 0.0
    %119 = vmatpush1.msra.mxu0 %v87
    %120 = vmatprep.subr.mxu0 0.0
    %121 = vmatpush1.msra.mxu0 %v88
    %122 = vmatprep.subr.mxu0 0.0
    %123 = vmatpush1.msra.mxu0 %v89
    %124 = vmatprep.subr.mxu0 0.0
    %125 = vmatpush1.msra.mxu0 %v90
    %126 = vmatprep.subr.mxu0 0.0
    %127 = vmatpush1.msra.mxu0 %v91
    %128 = vmatprep.subr.mxu0 0.0
    %129 = vmatpush1.msra.mxu0 0.0
    %130 = vmatprep.subr.mxu0 0.0
    %131 = vmatpush1.msra.mxu0 0.0
    %132 = vmatprep.subr.mxu0 0.0
    %133 = vmatpush1.msra.mxu0 0.0
    %134 = vmatprep.subr.mxu0 0.0
    %135 = vmatpush1.msra.mxu0 0.0
    %136 = vmatprep.subr.mxu0 0.0
    %137 = vmatpush1.msra.mxu0 0.0
    %138 = vmatprep.subr.mxu0 0.0
    %139 = vmatpush1.msra.mxu0 0.0
    %140 = vmatprep.subr.mxu0 0.0
    %141 = vmatpush1.msra.mxu0 0.0
    %142 = vmatprep.subr.mxu0 0.0
    %143 = vmatpush1.msra.mxu0 0.0
    %144 = vmatprep.subr.mxu0 0.0
    %145 = vmatpush1.msra.mxu0 0.0
    %146 = vmatprep.subr.mxu0 0.0
    %147 = vmatpush1.msra.mxu0 0.0
    %148 = vmatprep.subr.mxu0 0.0
    %149 = vmatpush1.msra.mxu0 0.0
    %150 = vmatprep.subr.mxu0 0.0
    %151 = vmatpush1.msra.mxu0 0.0
    %152 = vmatprep.subr.mxu0 0.0
    %153 = vmatpush1.msra.mxu0 0.0
    %154 = vmatprep.subr.mxu0 0.0
    %155 = vmatpush1.msra.mxu0 0.0
    %156 = vmatprep.subr.mxu0 0.0
    %157 = vmatpush1.msra.mxu0 0.0
    %158 = vmatprep.subr.mxu0 0.0
    %159 = vmatpush1.msra.mxu0 0.0
    %160 = vmatprep.mubr.f32.mxu0 0.0
    %161 = vmatmul.mubr.f32.gmra.mrb[0].mxu0 %v74
    %v162 = vpop.f32.mrb[0].mxu0
    %v163 = vadd.f32 %v95, %v162
    %v164 = vpop.f32.mrb[0].mxu0
    %165 = vdwg.mxu0
    %v166 = vmax.f32 %v163, 0.0
    %167 = vadd.xlane.f32.xlu0 %v166
    %v168 = vpop.xlane.xlu0 %167
    %v169 = vmul.f32 %v166, %v166
    %170 = vadd.xlane.f32.xlu0 %v169
    %v171 = vpop.xlane.xlu0 %170
    %v172 = vmul.f32 %v168, 0.015625
    %v173 = vmul.f32 %v171, 0.015625
    %v174 = vmul.f32 %v172, %v172
    %v175 = vsub.f32 %v173, %v174
    %v176 = vmax.f32 %v175, 0.0
    %v177 = vsub.f32 %v166, %v172
    %v178 = vadd.f32 %v176, 1e-05
    %v179 = vrsqrt.pop %v178
    %v180 = vmul.f32 %v177, %v179
    %v181 = vlaneseq
    %v182 = vshrl.u32 %v181, 7
    %v183 = vsub.s32 1, %v182
    %v184 = vrot.slane %v75, %v183
    %v185 = vmul.f32 %v180, %v184
    %v186 = vlaneseq
    %v187 = vshrl.u32 %v186, 7
    %v188 = vsub.s32 2, %v187
    %v189 = vrot.slane %v75, %v188
    %v190 = vadd.f32 %v185, %v189
    %v191 = vld [vmem:[#allocation7] sm:$0xff]
    %v192 = vld [vmem:[#allocation7 + $0x8] sm:$0xff]
    %v193 = vld [vmem:[#allocation7 + $0x10] sm:$0xff]
    %v194 = vld [vmem:[#allocation7 + $0x18] sm:$0xff]
    %v195 = vld [vmem:[#allocation7 + $0x20] sm:$0xff]
    %v196 = vld [vmem:[#allocation7 + $0x28] sm:$0xff]
    %v197 = vld [vmem:[#allocation7 + $0x30] sm:$0xff]
    %v198 = vld [vmem:[#allocation7 + $0x38] sm:$0xff]
    %v199 = vld [vmem:[#allocation7 + $0x40] sm:$0xff]
    %v200 = vld [vmem:[#allocation7 + $0x48] sm:$0xff]
    %v201 = vld [vmem:[#allocation7 + $0x50] sm:$0xff]
    %v202 = vld [vmem:[#allocation7 + $0x58] sm:$0xff]
    %v203 = vld [vmem:[#allocation7 + $0x60] sm:$0xff]
    %v204 = vld [vmem:[#allocation7 + $0x68] sm:$0xff]
    %v205 = vld [vmem:[#allocation7 + $0x70] sm:$0xff]
    %v206 = vld [vmem:[#allocation7 + $0x78] sm:$0xff]
    %v207 = vlaneseq
    %v208 = vshrl.u32 %v207, 7
    %v209 = vsub.s32 3, %v208
    %v210 = vrot.slane %v75, %v209
    %211 = vmatprep.subr.mxu0 0.0
    %212 = vmatpush1.msra.mxu0 %v191
    %213 = vmatprep.subr.mxu0 0.0
    %214 = vmatpush1.msra.mxu0 %v192
    %215 = vmatprep.subr.mxu0 0.0
    %216 = vmatpush1.msra.mxu0 %v193
    %217 = vmatprep.subr.mxu0 0.0
    %218 = vmatpush1.msra.mxu0 %v194
    %219 = vmatprep.subr.mxu0 0.0
    %220 = vmatpush1.msra.mxu0 %v195
    %221 = vmatprep.subr.mxu0 0.0
    %222 = vmatpush1.msra.mxu0 %v196
    %223 = vmatprep.subr.mxu0 0.0
    %224 = vmatpush1.msra.mxu0 %v197
    %225 = vmatprep.subr.mxu0 0.0
    %226 = vmatpush1.msra.mxu0 %v198
    %227 = vmatprep.subr.mxu0 0.0
    %228 = vmatpush1.msra.mxu0 %v199
    %229 = vmatprep.subr.mxu0 0.0
    %230 = vmatpush1.msra.mxu0 %v200
    %231 = vmatprep.subr.mxu0 0.0
    %232 = vmatpush1.msra.mxu0 %v201
    %233 = vmatprep.subr.mxu0 0.0
    %234 = vmatpush1.msra.mxu0 %v202
    %235 = vmatprep.subr.mxu0 0.0
    %236 = vmatpush1.msra.mxu0 %v203
    %237 = vmatprep.subr.mxu0 0.0
    %238 = vmatpush1.msra.mxu0 %v204
    %239 = vmatprep.subr.mxu0 0.0
    %240 = vmatpush1.msra.mxu0 %v205
    %241 = vmatprep.subr.mxu0 0.0
    %242 = vmatpush1.msra.mxu0 %v206
    %243 = vmatprep.subr.mxu0 0.0
    %244 = vmatpush1.msra.mxu0 0.0
    %245 = vmatprep.subr.mxu0 0.0
    %246 = vmatpush1.msra.mxu0 0.0
    %247 = vmatprep.subr.mxu0 0.0
    %248 = vmatpush1.msra.mxu0 0.0
    %249 = vmatprep.subr.mxu0 0.0
    %250 = vmatpush1.msra.mxu0 0.0
    %251 = vmatprep.subr.mxu0 0.0
    %252 = vmatpush1.msra.mxu0 0.0
    %253 = vmatprep.subr.mxu0 0.0
    %254 = vmatpush1.msra.mxu0 0.0
    %255 = vmatprep.subr.mxu0 0.0
    %256 = vmatpush1.msra.mxu0 0.0
    %257 = vmatprep.subr.mxu0 0.0
    %258 = vmatpush1.msra.mxu0 0.0
    %259 = vmatprep.subr.mxu0 0.0
    %260 = vmatpush1.msra.mxu0 0.0
    %261 = vmatprep.subr.mxu0 0.0
    %262 = vmatpush1.msra.mxu0 0.0
    %263 = vmatprep.subr.mxu0 0.0
    %264 = vmatpush1.msra.mxu0 0.0
    %265 = vmatprep.subr.mxu0 0.0
    %266 = vmatpush1.msra.mxu0 0.0
    %267 = vmatprep.subr.mxu0 0.0
    %268 = vmatpush1.msra.mxu0 0.0
    %269 = vmatprep.subr.mxu0 0.0
    %270 = vmatpush1.msra.mxu0 0.0
    %271 = vmatprep.subr.mxu0 0.0
    %272 = vmatpush1.msra.mxu0 0.0
    %273 = vmatprep.subr.mxu0 0.0
    %274 = vmatpush1.msra.mxu0 0.0
    %275 = vmatprep.mubr.f32.mxu0 0.0
    %276 = vmatmul.mubr.f32.gmra.mrb[0].mxu0 %v190
    %v277 = vpop.f32.mrb[0].mxu0
    %v278 = vadd.f32 %v210, %v277
    %v279 = vpop.f32.mrb[0].mxu0
    %280 = vdwg.mxu0
    %v281 = vmax.f32 %v278, 0.0
    %282 = vadd.xlane.f32.xlu0 %v281
    %v283 = vpop.xlane.xlu0 %282
    %v284 = vmul.f32 %v281, %v281
    %285 = vadd.xlane.f32.xlu0 %v284
    %v286 = vpop.xlane.xlu0 %285
    %v287 = vmul.f32 %v283, 0.03125
    %v288 = vmul.f32 %v286, 0.03125
    %v289 = vmul.f32 %v287, %v287
    %v290 = vsub.f32 %v288, %v289
    %v291 = vmax.f32 %v290, 0.0
    %v292 = vsub.f32 %v281, %v287
    %v293 = vadd.f32 %v291, 1e-05
    %v294 = vrsqrt.pop %v293
    %v295 = vmul.f32 %v292, %v294
    %v296 = vlaneseq
    %v297 = vshrl.u32 %v296, 7
    %v298 = vsub.s32 4, %v297
    %v299 = vrot.slane %v75, %v298
    %v300 = vmul.f32 %v295, %v299
    %v301 = vlaneseq
    %v302 = vshrl.u32 %v301, 7
    %v303 = vsub.s32 5, %v302
    %v304 = vrot.slane %v75, %v303
    %v305 = vadd.f32 %v300, %v304
    %v306 = vld [vmem:[#allocation8] sm:$0xff]
    %v307 = vld [vmem:[#allocation8 + $0x8] sm:$0xff]
    %v308 = vld [vmem:[#allocation8 + $0x10] sm:$0xff]
    %v309 = vld [vmem:[#allocation8 + $0x18] sm:$0xff]
    %v310 = vld [vmem:[#allocation8 + $0x20] sm:$0xff]
    %v311 = vld [vmem:[#allocation8 + $0x28] sm:$0xff]
    %v312 = vld [vmem:[#allocation8 + $0x30] sm:$0xff]
    %v313 = vld [vmem:[#allocation8 + $0x38] sm:$0xff]
    %v314 = vld [vmem:[#allocation8 + $0x40] sm:$0xff]
    %v315 = vld [vmem:[#allocation8 + $0x48] sm:$0xff]
    %v316 = vld [vmem:[#allocation8 + $0x50] sm:$0xff]
    %v317 = vld [vmem:[#allocation8 + $0x58] sm:$0xff]
    %v318 = vld [vmem:[#allocation8 + $0x60] sm:$0xff]
    %v319 = vld [vmem:[#allocation8 + $0x68] sm:$0xff]
    %v320 = vld [vmem:[#allocation8 + $0x70] sm:$0xff]
    %v321 = vld [vmem:[#allocation8 + $0x78] sm:$0xff]
    %v322 = vlaneseq
    %v323 = vshrl.u32 %v322, 7
    %v324 = vsub.s32 6, %v323
    %v325 = vrot.slane %v75, %v324
    %326 = vmatprep.subr.mxu0 0.0
    %327 = vmatpush1.msra.mxu0 %v306
    %328 = vmatprep.subr.mxu0 0.0
    %329 = vmatpush1.msra.mxu0 %v307
    %330 = vmatprep.subr.mxu0 0.0
    %331 = vmatpush1.msra.mxu0 %v308
    %332 = vmatprep.subr.mxu0 0.0
    %333 = vmatpush1.msra.mxu0 %v309
    %334 = vmatprep.subr.mxu0 0.0
    %335 = vmatpush1.msra.mxu0 %v310
    %336 = vmatprep.subr.mxu0 0.0
    %337 = vmatpush1.msra.mxu0 %v311
    %338 = vmatprep.subr.mxu0 0.0
    %339 = vmatpush1.msra.mxu0 %v312
    %340 = vmatprep.subr.mxu0 0.0
    %341 = vmatpush1.msra.mxu0 %v313
    %342 = vmatprep.subr.mxu0 0.0
    %343 = vmatpush1.msra.mxu0 %v314
    %344 = vmatprep.subr.mxu0 0.0
    %345 = vmatpush1.msra.mxu0 %v315
    %346 = vmatprep.subr.mxu0 0.0
    %347 = vmatpush1.msra.mxu0 %v316
    %348 = vmatprep.subr.mxu0 0.0
    %349 = vmatpush1.msra.mxu0 %v317
    %350 = vmatprep.subr.mxu0 0.0
    %351 = vmatpush1.msra.mxu0 %v318
    %352 = vmatprep.subr.mxu0 0.0
    %353 = vmatpush1.msra.mxu0 %v319
    %354 = vmatprep.subr.mxu0 0.0
    %355 = vmatpush1.msra.mxu0 %v320
    %356 = vmatprep.subr.mxu0 0.0
    %357 = vmatpush1.msra.mxu0 %v321
    %358 = vmatprep.subr.mxu0 0.0
    %359 = vmatpush1.msra.mxu0 0.0
    %360 = vmatprep.subr.mxu0 0.0
    %361 = vmatpush1.msra.mxu0 0.0
    %362 = vmatprep.subr.mxu0 0.0
    %363 = vmatpush1.msra.mxu0 0.0
    %364 = vmatprep.subr.mxu0 0.0
    %365 = vmatpush1.msra.mxu0 0.0
    %366 = vmatprep.subr.mxu0 0.0
    %367 = vmatpush1.msra.mxu0 0.0
    %368 = vmatprep.subr.mxu0 0.0
    %369 = vmatpush1.msra.mxu0 0.0
    %370 = vmatprep.subr.mxu0 0.0
    %371 = vmatpush1.msra.mxu0 0.0
    %372 = vmatprep.subr.mxu0 0.0
    %373 = vmatpush1.msra.mxu0 0.0
    %374 = vmatprep.subr.mxu0 0.0
    %375 = vmatpush1.msra.mxu0 0.0
    %376 = vmatprep.subr.mxu0 0.0
    %377 = vmatpush1.msra.mxu0 0.0
    %378 = vmatprep.subr.mxu0 0.0
    %379 = vmatpush1.msra.mxu0 0.0
    %380 = vmatprep.subr.mxu0 0.0
    %381 = vmatpush1.msra.mxu0 0.0
    %382 = vmatprep.subr.mxu0 0.0
    %383 = vmatpush1.msra.mxu0 0.0
    %384 = vmatprep.subr.mxu0 0.0
    %385 = vmatpush1.msra.mxu0 0.0
    %386 = vmatprep.subr.mxu0 0.0
    %387 = vmatpush1.msra.mxu0 0.0
    %388 = vmatprep.subr.mxu0 0.0
    %389 = vmatpush1.msra.mxu0 0.0
    %390 = vmatprep.mubr.f32.mxu0 0.0
    %391 = vmatmul.mubr.f32.gmra.mrb[0].mxu0 %v305
    %v392 = vpop.f32.mrb[0].mxu0
    %v393 = vadd.f32 %v325, %v392
    %v394 = vpop.f32.mrb[0].mxu0
    %395 = vdwg.mxu0
    %v396 = vtanh.pop %v393
    %397 = vst [vmem:[#allocation10] sm:$0xff] %v396
    // Predicated region
    $region38: #{tpu_custom_call.1} parent=1 // pred_check
      _
    $region39: #{tpu_custom_call.1} parent=1 // pred_check_branch
      %399 = sbr.rel (0) target = $region41
    $region40: #{tpu_custom_call.1} parent=1 // pred_region
      %s401 = ssub.s32 128, 128
      %402 = vsyncadd [#allocation4], %s401
      %s404 = sshll.u32 [#allocation10], 4
      %s405 = int_to_ptr.vmem [resolvable:$true] %s404
      %407 = dma.vmem_to_hbm [thread:$0]  %s405, 128, %s5, [#allocation4]
    $region41: #{tpu_custom_call.1} parent=1 // pred_fallthru
      _
    // Predicated region
    $region42: #{tpu_custom_call.1} parent=1 // pred_check
      _
    $region43: #{tpu_custom_call.1} parent=1 // pred_check_branch
      %409 = sbr.rel (0) target = $region45
    $region44: #{tpu_custom_call.1} parent=1 // pred_region
      %410 = dma.done [#allocation4], 128
    $region45: #{tpu_custom_call.1} parent=1 // pred_fallthru
      _
    %411 = vsyncpa [#allocation3], 1
    %412 = vsyncpa [#allocation6], 1
    %413 = vsyncpa [#allocation9], 1
    %414 = vsyncpa [#allocation4], 1

</llo_original>
